<compile_context>
chip_gen: v6e
topology: v6e:2x2x1
jax: 0.10.0
libtpu: 0.0.40
codegen_flags: <defaults>
</compile_context>

<pallas_src>
import functools

import jax
import jax.numpy as jnp
from jax.experimental import pallas as pl
from jax.experimental.pallas import tpu as pltpu


_ROW_CHUNK = 32      # sublane rows per inner-compute chunk (dense path)
_LANE_CHUNK = 1024   # lanes per inner-compute chunk (lane fallback path)
_MAX_TN = 8          # cap on batch blocking (bounds static unroll)


def _cdiv(a, b):
    return -(-a // b)


def _chip_params():
    """(target bytes per grid step, scoped-VMEM limit) per TPU generation."""
    kind = ""
    try:
        kind = jax.devices()[0].device_kind.lower()
    except Exception:
        pass
    if "v5 lite" in kind or "v5e" in kind or "v5litepod" in kind:
        return 1536 * 1024, 32 * 1024 * 1024        # ~0.82 TB/s HBM, small scoped VMEM
    if "v6" in kind:
        return 3 * 1024 * 1024, 64 * 1024 * 1024    # 128 MiB physical VMEM
    if "v7" in kind:
        return 6 * 1024 * 1024, 48 * 1024 * 1024    # 64 MiB physical VMEM -> headroom
    return 2 * 1024 * 1024, 32 * 1024 * 1024


# ---------------------------------------------------------------------------
# Dense path: x as (N, Cin, R, 128); weights/bias as SMEM scalars (VPU FMAs).
# ---------------------------------------------------------------------------
def _outconv_dense_kernel(x_ref, w_ref, b_ref, o_ref, *, cin, cout):
    # x_ref: (t_n, Cin, t_r, 128) VMEM;  o_ref: (t_n, Cout, t_r, 128) VMEM
    # w_ref: (Cout, Cin) f32 SMEM;       b_ref: (Cout,) f32 SMEM
    t_n = x_ref.shape[0]
    t_r = x_ref.shape[2]
    for n in range(t_n):                                 # static unroll (t_n <= 8)
        for cs in range(0, t_r, _ROW_CHUNK):             # bounded accumulator liveness
            cl = min(_ROW_CHUNK, t_r - cs)
            # Load each input-channel plane once per chunk; reused for every oc.
            xs = [x_ref[n, ic, cs:cs + cl, :].astype(jnp.float32) for ic in range(cin)]
            for oc in range(cout):
                acc = xs[0] * w_ref[oc, 0]               # scalar(SMEM) * vector FMAs
                for ic in range(1, cin):
                    acc = acc + xs[ic] * w_ref[oc, ic]
                o_ref[n, oc, cs:cs + cl, :] = (acc + b_ref[oc]).astype(o_ref.dtype)


def _dense_tiles(n, cin, cout, r, target_bytes):
    bpr = (cin + cout) * 128 * 4                 # bytes moved per sublane-row per image
    img_bytes = r * bpr
    if img_bytes >= target_bytes:
        t_n = 1
        t_r = min(r, max(8, (target_bytes // bpr) // 8 * 8))
    else:
        t_r = r
        t_n = min(n, _MAX_TN, max(1, _cdiv(target_bytes, img_bytes)))
    # Ensure >= 2 parallel grid steps when possible (v7x has 2 TensorCores).
    if _cdiv(n, t_n) * _cdiv(r, t_r) < 2:
        if n > 1:
            t_n = _cdiv(n, 2)
        elif r > 8:
            t_r = ((_cdiv(r, 2) + 7) // 8) * 8   # multiple of 8 -> ragged tail is OK
    return t_n, t_r


# ---------------------------------------------------------------------------
# Lane fallback path: x as (N, Cin, HW); MXU matmul for larger channel counts.
# ---------------------------------------------------------------------------
def _outconv_lane_kernel(x_ref, w_ref, b_ref, o_ref, *, use_mxu):
    # x_ref: (1, Cin, t_hw); w_ref: (Cout, Cin); b_ref: (Cout, 1); o_ref: (1, Cout, t_hw)
    w = w_ref[...].astype(jnp.float32)
    b = b_ref[...].astype(jnp.float32)
    if use_mxu:
        x = x_ref[0].astype(jnp.float32)                 # (Cin, t_hw), lane-dense
        acc = jnp.dot(w, x, preferred_element_type=jnp.float32)
        o_ref[0] = (acc + b).astype(o_ref.dtype)
    else:
        cin = x_ref.shape[1]
        t_hw = x_ref.shape[2]
        for cs in range(0, t_hw, _LANE_CHUNK):           # bounded accumulator liveness
            cl = min(_LANE_CHUNK, t_hw - cs)
            xb = x_ref[0, :, cs:cs + cl].astype(jnp.float32)    # (Cin, cl)
            acc = w[:, 0:1] * xb[0:1, :]
            for ic in range(1, cin):
                acc = acc + w[:, ic:ic + 1] * xb[ic:ic + 1, :]
            o_ref[0, :, cs:cs + cl] = (acc + b).astype(o_ref.dtype)


def _lane_tile(n, cin, cout, hw, target_bytes, use_mxu):
    bpc = (cin + cout) * 4                       # bytes moved per spatial column
    if not use_mxu:
        # keep the static lane-chunk unroll small on the VPU fallback
        target_bytes = min(target_bytes, 16 * _LANE_CHUNK * bpc)
    if hw <= 256 or hw * bpc <= target_bytes:
        t_hw = hw
    else:
        t_hw = max(128, min(hw // 128 * 128, (target_bytes // bpc) // 128 * 128))
    # Ensure >= 2 grid steps for single-image inference (v7x dual TensorCore).
    if n == 1 and t_hw == hw and hw >= 256:
        t_hw = max(128, _cdiv(hw, 2) // 128 * 128)
    return t_hw


# ---------------------------------------------------------------------------
# Wrapper
# ---------------------------------------------------------------------------
@functools.partial(jax.jit, static_argnames=("t_hw_override",))
def outconv(x_nchw, weight, bias, *, t_hw_override=None):
    """1x1 conv; semantics of nn.Conv2d(in_channels, num_classes, kernel_size=1).

    x_nchw: (N, Cin, H, W); weight: (Cout, Cin, 1, 1) (PyTorch layout); bias: (Cout,)
    Returns (N, Cout, H, W) in x's dtype.

    t_hw_override forces the generic lane-layout path with the given spatial
    tile (multiple of 128) — used to exercise the ragged-tile path in tests.
    """
    n, cin, h, w = x_nchw.shape
    cout = weight.shape[0]
    hw = h * w
    target_bytes, vmem_limit = _chip_params()

    w_mat = weight.reshape(cout, cin).astype(jnp.float32)
    b_vec = bias.reshape(cout).astype(jnp.float32)
    out_dtype = x_nchw.dtype

    dense_ok = (hw % 128 == 0) and cin <= 8 and cout <= 16 and t_hw_override is None

    if dense_ok:
        # --- sublane+lane dense path (fully packed vregs / unmasked stores) ---
        r = hw // 128
        x4 = x_nchw.reshape(n, cin, r, 128)               # free reshape, NCHW stays put
        t_n, t_r = _dense_tiles(n, cin, cout, r, target_bytes)
        grid = (_cdiv(n, t_n), _cdiv(r, t_r))
        out4 = pl.pallas_call(
            functools.partial(_outconv_dense_kernel, cin=cin, cout=cout),
            out_shape=jax.ShapeDtypeStruct((n, cout, r, 128), out_dtype),
            grid_spec=pltpu.PrefetchScalarGridSpec(
                num_scalar_prefetch=0,
                grid=grid,
                in_specs=[
                    pl.BlockSpec((t_n, cin, t_r, 128), lambda ni, ri: (ni, 0, ri, 0)),
                    pl.BlockSpec(memory_space=pltpu.MemorySpace.SMEM),   # weights (scalars)
                    pl.BlockSpec(memory_space=pltpu.MemorySpace.SMEM),   # bias (scalars)
                ],
                out_specs=pl.BlockSpec((t_n, cout, t_r, 128),
                                       lambda ni, ri: (ni, 0, ri, 0)),
            ),
            compiler_params=pltpu.CompilerParams(
                dimension_semantics=("parallel", "parallel"),
                vmem_limit_bytes=vmem_limit,
            ),
        )(x4, w_mat, b_vec)
        return out4.reshape(n, cout, h, w)

    # --- generic lane-layout path (ragged HW and/or larger channel counts) ---
    use_mxu = (cin > 8) or (cout > 16)
    x3 = x_nchw.reshape(n, cin, hw)
    b_mat = b_vec.reshape(cout, 1)
    if t_hw_override is not None:
        t_hw = int(t_hw_override)
    else:
        t_hw = _lane_tile(n, cin, cout, hw, target_bytes, use_mxu)
    grid = (n, _cdiv(hw, t_hw))
    out3 = pl.pallas_call(
        functools.partial(_outconv_lane_kernel, use_mxu=use_mxu),
        out_shape=jax.ShapeDtypeStruct((n, cout, hw), out_dtype),
        grid_spec=pltpu.PrefetchScalarGridSpec(
            num_scalar_prefetch=0,
            grid=grid,
            in_specs=[
                pl.BlockSpec((1, cin, t_hw), lambda ni, j: (ni, 0, j)),
                pl.BlockSpec((cout, cin), lambda ni, j: (0, 0)),   # resident weights
                pl.BlockSpec((cout, 1), lambda ni, j: (0, 0)),     # resident bias
            ],
            out_specs=pl.BlockSpec((1, cout, t_hw), lambda ni, j: (ni, 0, j)),
        ),
        compiler_params=pltpu.CompilerParams(
            dimension_semantics=("parallel", "parallel"),
            vmem_limit_bytes=vmem_limit,
        ),
    )(x3, w_mat, b_mat)
    return out3.reshape(n, cout, h, w)


if __name__ == "__main__":
    key = jax.random.PRNGKey(0)
    kx, kw, kb, kx2, kx3, kw3, kb3 = jax.random.split(key, 7)

    # Test 1: module config — dense sublane+lane path (HW % 128 == 0, tiny channels).
    in_channels, num_classes = 4, 3
    N, H, W = 2, 16, 16
    x = jax.random.normal(kx, (N, in_channels, H, W), dtype=jnp.float32)
    weight = jax.random.normal(kw, (num_classes, in_channels, 1, 1), dtype=jnp.float32) * 0.1
    bias = jax.random.normal(kb, (num_classes,), dtype=jnp.float32) * 0.1

    y = jax.block_until_ready(outconv(x, weight, bias))
    ref = jnp.einsum("nihw,oi->nohw", x, weight.reshape(num_classes, in_channels)) \
          + bias.reshape(1, num_classes, 1, 1)
    assert y.shape == (N, num_classes, H, W)
    assert jnp.allclose(y, ref, atol=1e-5, rtol=1e-5)

    # Test 2: HW not a multiple of 128, with a forced small tile so the last
    # spatial tile is partially out-of-bounds (exercises the ragged fallback).
    H2, W2 = 6, 25   # HW = 150
    x2 = jax.random.normal(kx2, (1, in_channels, H2, W2), dtype=jnp.float32)
    y2 = jax.block_until_ready(outconv(x2, weight, bias, t_hw_override=128))
    ref2 = jnp.einsum("nihw,oi->nohw", x2, weight.reshape(num_classes, in_channels)) \
           + bias.reshape(1, num_classes, 1, 1)
    assert jnp.allclose(y2, ref2, atol=1e-5, rtol=1e-5)

    # Test 3: larger channel count -> MXU path (spatial stays lane-dense).
    cin3 = 32
    x3 = jax.random.normal(kx3, (1, cin3, 16, 16), dtype=jnp.float32)
    w3 = jax.random.normal(kw3, (num_classes, cin3, 1, 1), dtype=jnp.float32) * 0.1
    b3 = jax.random.normal(kb3, (num_classes,), dtype=jnp.float32) * 0.1
    y3 = jax.block_until_ready(outconv(x3, w3, b3))
    ref3 = jnp.einsum("nihw,oi->nohw", x3, w3.reshape(num_classes, cin3)) \
           + b3.reshape(1, num_classes, 1, 1)
    assert jnp.allclose(y3, ref3, atol=1e-3, rtol=1e-3)

    print("KERNEL_OK")
</pallas_src>

<mosaic_0001>
module attributes {stable_mosaic.version = 11 : i64} {
  func.func @_outconv_dense_kernel(%arg0: i32, %arg1: i32, %arg2: memref<1x4x2x128xf32, #tpu.memory_space<vmem>>, %arg3: memref<3x4xf32, #tpu.memory_space<smem>>, %arg4: memref<3xf32, #tpu.memory_space<smem>>, %arg5: memref<1x3x2x128xf32, #tpu.memory_space<vmem>>) attributes {dimension_semantics = [#tpu.dimension_semantics<parallel>, #tpu.dimension_semantics<parallel>], iteration_bounds = array<i64: 2, 1>, scalar_prefetch = 0 : i64, scratch_operands = 0 : i64, tpu.core_type = #tpu.core_type<tc>, window_params = [{transform_indices = @transform_0, window_bounds = array<i64: 1, 4, 2, 128>}, {transform_indices = @transform_1, window_bounds = array<i64: 3, 4>}, {transform_indices = @transform_2, window_bounds = array<i64: 3>}, {transform_indices = @transform_3, window_bounds = array<i64: 1, 3, 2, 128>}]} {
    %c0 = arith.constant 0 : index
    %c0_0 = arith.constant 0 : index
    %c0_1 = arith.constant 0 : index
    %c0_2 = arith.constant 0 : index
    %0 = vector.load %arg2[%c0, %c0_0, %c0_1, %c0_2] : memref<1x4x2x128xf32, #tpu.memory_space<vmem>>, vector<1x1x2x128xf32>
    %1 = vector.shape_cast %0 : vector<1x1x2x128xf32> to vector<2x128xf32>
    %c0_3 = arith.constant 0 : index
    %c1 = arith.constant 1 : index
    %c0_4 = arith.constant 0 : index
    %c0_5 = arith.constant 0 : index
    %2 = vector.load %arg2[%c0_3, %c1, %c0_4, %c0_5] : memref<1x4x2x128xf32, #tpu.memory_space<vmem>>, vector<1x1x2x128xf32>
    %3 = vector.shape_cast %2 : vector<1x1x2x128xf32> to vector<2x128xf32>
    %c0_6 = arith.constant 0 : index
    %c2 = arith.constant 2 : index
    %c0_7 = arith.constant 0 : index
    %c0_8 = arith.constant 0 : index
    %4 = vector.load %arg2[%c0_6, %c2, %c0_7, %c0_8] : memref<1x4x2x128xf32, #tpu.memory_space<vmem>>, vector<1x1x2x128xf32>
    %5 = vector.shape_cast %4 : vector<1x1x2x128xf32> to vector<2x128xf32>
    %c0_9 = arith.constant 0 : index
    %c3 = arith.constant 3 : index
    %c0_10 = arith.constant 0 : index
    %c0_11 = arith.constant 0 : index
    %6 = vector.load %arg2[%c0_9, %c3, %c0_10, %c0_11] : memref<1x4x2x128xf32, #tpu.memory_space<vmem>>, vector<1x1x2x128xf32>
    %7 = vector.shape_cast %6 : vector<1x1x2x128xf32> to vector<2x128xf32>
    %c0_12 = arith.constant 0 : index
    %c0_13 = arith.constant 0 : index
    %8 = memref.load %arg3[%c0_12, %c0_13] : memref<3x4xf32, #tpu.memory_space<smem>>
    %9 = vector.broadcast %8 : f32 to vector<2x128xf32>
    %10 = arith.mulf %1, %9 : vector<2x128xf32>
    %c0_14 = arith.constant 0 : index
    %c1_15 = arith.constant 1 : index
    %11 = memref.load %arg3[%c0_14, %c1_15] : memref<3x4xf32, #tpu.memory_space<smem>>
    %12 = vector.broadcast %11 : f32 to vector<2x128xf32>
    %13 = arith.mulf %3, %12 : vector<2x128xf32>
    %14 = arith.addf %10, %13 : vector<2x128xf32>
    %c0_16 = arith.constant 0 : index
    %c2_17 = arith.constant 2 : index
    %15 = memref.load %arg3[%c0_16, %c2_17] : memref<3x4xf32, #tpu.memory_space<smem>>
    %16 = vector.broadcast %15 : f32 to vector<2x128xf32>
    %17 = arith.mulf %5, %16 : vector<2x128xf32>
    %18 = arith.addf %14, %17 : vector<2x128xf32>
    %c0_18 = arith.constant 0 : index
    %c3_19 = arith.constant 3 : index
    %19 = memref.load %arg3[%c0_18, %c3_19] : memref<3x4xf32, #tpu.memory_space<smem>>
    %20 = vector.broadcast %19 : f32 to vector<2x128xf32>
    %21 = arith.mulf %7, %20 : vector<2x128xf32>
    %22 = arith.addf %18, %21 : vector<2x128xf32>
    %c0_20 = arith.constant 0 : index
    %23 = memref.load %arg4[%c0_20] : memref<3xf32, #tpu.memory_space<smem>>
    %24 = vector.broadcast %23 : f32 to vector<2x128xf32>
    %25 = arith.addf %22, %24 : vector<2x128xf32>
    %c0_21 = arith.constant 0 : index
    %c0_22 = arith.constant 0 : index
    %c0_23 = arith.constant 0 : index
    %c0_24 = arith.constant 0 : index
    %26 = vector.load %arg5[%c0_21, %c0_22, %c0_23, %c0_24] : memref<1x3x2x128xf32, #tpu.memory_space<vmem>>, vector<1x1x2x128xf32>
    %27 = vector.shape_cast %26 : vector<1x1x2x128xf32> to vector<2x128xf32>
    %28 = vector.shape_cast %25 : vector<2x128xf32> to vector<1x1x2x128xf32>
    tpu.vector_store %arg5[%c0_21, %c0_22, %c0_23, %c0_24], %28 {strides = array<i32>} : memref<1x3x2x128xf32, #tpu.memory_space<vmem>>, vector<1x1x2x128xf32>,
    %c1_25 = arith.constant 1 : index
    %c0_26 = arith.constant 0 : index
    %29 = memref.load %arg3[%c1_25, %c0_26] : memref<3x4xf32, #tpu.memory_space<smem>>
    %30 = vector.broadcast %29 : f32 to vector<2x128xf32>
    %31 = arith.mulf %1, %30 : vector<2x128xf32>
    %c1_27 = arith.constant 1 : index
    %c1_28 = arith.constant 1 : index
    %32 = memref.load %arg3[%c1_27, %c1_28] : memref<3x4xf32, #tpu.memory_space<smem>>
    %33 = vector.broadcast %32 : f32 to vector<2x128xf32>
    %34 = arith.mulf %3, %33 : vector<2x128xf32>
    %35 = arith.addf %31, %34 : vector<2x128xf32>
    %c1_29 = arith.constant 1 : index
    %c2_30 = arith.constant 2 : index
    %36 = memref.load %arg3[%c1_29, %c2_30] : memref<3x4xf32, #tpu.memory_space<smem>>
    %37 = vector.broadcast %36 : f32 to vector<2x128xf32>
    %38 = arith.mulf %5, %37 : vector<2x128xf32>
    %39 = arith.addf %35, %38 : vector<2x128xf32>
    %c1_31 = arith.constant 1 : index
    %c3_32 = arith.constant 3 : index
    %40 = memref.load %arg3[%c1_31, %c3_32] : memref<3x4xf32, #tpu.memory_space<smem>>
    %41 = vector.broadcast %40 : f32 to vector<2x128xf32>
    %42 = arith.mulf %7, %41 : vector<2x128xf32>
    %43 = arith.addf %39, %42 : vector<2x128xf32>
    %c1_33 = arith.constant 1 : index
    %44 = memref.load %arg4[%c1_33] : memref<3xf32, #tpu.memory_space<smem>>
    %45 = vector.broadcast %44 : f32 to vector<2x128xf32>
    %46 = arith.addf %43, %45 : vector<2x128xf32>
    %c0_34 = arith.constant 0 : index
    %c1_35 = arith.constant 1 : index
    %c0_36 = arith.constant 0 : index
    %c0_37 = arith.constant 0 : index
    %47 = vector.load %arg5[%c0_34, %c1_35, %c0_36, %c0_37] : memref<1x3x2x128xf32, #tpu.memory_space<vmem>>, vector<1x1x2x128xf32>
    %48 = vector.shape_cast %47 : vector<1x1x2x128xf32> to vector<2x128xf32>
    %49 = vector.shape_cast %46 : vector<2x128xf32> to vector<1x1x2x128xf32>
    tpu.vector_store %arg5[%c0_34, %c1_35, %c0_36, %c0_37], %49 {strides = array<i32>} : memref<1x3x2x128xf32, #tpu.memory_space<vmem>>, vector<1x1x2x128xf32>,
    %c2_38 = arith.constant 2 : index
    %c0_39 = arith.constant 0 : index
    %50 = memref.load %arg3[%c2_38, %c0_39] : memref<3x4xf32, #tpu.memory_space<smem>>
    %51 = vector.broadcast %50 : f32 to vector<2x128xf32>
    %52 = arith.mulf %1, %51 : vector<2x128xf32>
    %c2_40 = arith.constant 2 : index
    %c1_41 = arith.constant 1 : index
    %53 = memref.load %arg3[%c2_40, %c1_41] : memref<3x4xf32, #tpu.memory_space<smem>>
    %54 = vector.broadcast %53 : f32 to vector<2x128xf32>
    %55 = arith.mulf %3, %54 : vector<2x128xf32>
    %56 = arith.addf %52, %55 : vector<2x128xf32>
    %c2_42 = arith.constant 2 : index
    %c2_43 = arith.constant 2 : index
    %57 = memref.load %arg3[%c2_42, %c2_43] : memref<3x4xf32, #tpu.memory_space<smem>>
    %58 = vector.broadcast %57 : f32 to vector<2x128xf32>
    %59 = arith.mulf %5, %58 : vector<2x128xf32>
    %60 = arith.addf %56, %59 : vector<2x128xf32>
    %c2_44 = arith.constant 2 : index
    %c3_45 = arith.constant 3 : index
    %61 = memref.load %arg3[%c2_44, %c3_45] : memref<3x4xf32, #tpu.memory_space<smem>>
    %62 = vector.broadcast %61 : f32 to vector<2x128xf32>
    %63 = arith.mulf %7, %62 : vector<2x128xf32>
    %64 = arith.addf %60, %63 : vector<2x128xf32>
    %c2_46 = arith.constant 2 : index
    %65 = memref.load %arg4[%c2_46] : memref<3xf32, #tpu.memory_space<smem>>
    %66 = vector.broadcast %65 : f32 to vector<2x128xf32>
    %67 = arith.addf %64, %66 : vector<2x128xf32>
    %c0_47 = arith.constant 0 : index
    %c2_48 = arith.constant 2 : index
    %c0_49 = arith.constant 0 : index
    %c0_50 = arith.constant 0 : index
    %68 = vector.load %arg5[%c0_47, %c2_48, %c0_49, %c0_50] : memref<1x3x2x128xf32, #tpu.memory_space<vmem>>, vector<1x1x2x128xf32>
    %69 = vector.shape_cast %68 : vector<1x1x2x128xf32> to vector<2x128xf32>
    %70 = vector.shape_cast %67 : vector<2x128xf32> to vector<1x1x2x128xf32>
    tpu.vector_store %arg5[%c0_47, %c2_48, %c0_49, %c0_50], %70 {strides = array<i32>} : memref<1x3x2x128xf32, #tpu.memory_space<vmem>>, vector<1x1x2x128xf32>,
    return
  }
  func.func @transform_0(%arg0: i32, %arg1: i32) -> (i32, i32, i32, i32) {
    %c0_i32 = arith.constant 0 : i32
    %c0_i32_0 = arith.constant 0 : i32
    %c0_i32_1 = arith.constant 0 : i32
    return %arg0, %c0_i32, %arg1, %c0_i32_0 : i32, i32, i32, i32
  }
  func.func @transform_1(%arg0: i32, %arg1: i32) -> (i32, i32) {
    %c0_i32 = arith.constant 0 : i32
    %c0_i32_0 = arith.constant 0 : i32
    %c0_i32_1 = arith.constant 0 : i32
    return %c0_i32, %c0_i32_0 : i32, i32
  }
  func.func @transform_2(%arg0: i32, %arg1: i32) -> i32 {
    %c0_i32 = arith.constant 0 : i32
    %c0_i32_0 = arith.constant 0 : i32
    return %c0_i32 : i32
  }
  func.func @transform_3(%arg0: i32, %arg1: i32) -> (i32, i32, i32, i32) {
    %c0_i32 = arith.constant 0 : i32
    %c0_i32_0 = arith.constant 0 : i32
    %c0_i32_1 = arith.constant 0 : i32
    return %arg0, %c0_i32, %arg1, %c0_i32_0 : i32, i32, i32, i32
  }
}

</mosaic_0001>

<llo_original>
// kernel: outconv.1
$region0: #{outconv.1}
  #allocation0 [shape = 'u32[]', space=smem, size = 0x4, offset = 0x4, fixed_abs, tag = 'smem constant byte address 0x4 - core index']
  #allocation1 [shape = 'u32[144,128]{1,0:T(1,128)}', space=vmem, size = 0x12000, scoped, tag = 'internal scratch']
  %s0 = inlined_call_operand.vmem [shape: f32[2,4,2,128], index: 0, kind: input, shape index: {}]
  %s1 = inlined_call_operand.vmem [shape: f32[3,4], index: 1, kind: input, shape index: {}]
  %s2 = inlined_call_operand.vmem [shape: f32[3], index: 2, kind: input, shape index: {}]
  %s3 = inlined_call_operand.vmem [shape: f32[2,3,2,128], index: 3, kind: output, shape index: {}]
  %s4 = sld [smem:[#allocation0]]
  $region53: #{outconv.1} parent=0
    _
  %s6 = ssub.s32 1, %s4
  %s7 = scalar_select 0, %s6, %s4
  $region1: #{outconv.1} parent=0
    #allocation2 [shape = 'u8[2048]{0}', space=smem, size = 0x800, scoped, tag = 'input window, operand 1, single buffered']
    #allocation3 [shape = 's32[2]{0}', space=sflag, size = 0x8, scoped, tag = 'scoped memory for outconv.1']
    #allocation4 [shape = 'u8[512]{0}', space=smem, size = 0x200, scoped, tag = 'input window, operand 2, single buffered']
    #allocation5 [shape = 's32[1]{0}', space=sflag, size = 0x4, scoped, tag = 'scoped memory for outconv.1']
    %8 = vsyncpa [#allocation3], 0
    %9 = vsyncpa [#allocation5], 0
    loop: start=0, step=1, limit=4
    $region2: #{outconv.1} parent=1 // loop_pre_header
      _
    $region3: #{outconv.1} parent=1 // loop_header
      %s11 = sphi 0, %s15
      %p12 = scmp.ge.s32.totalorder %s11, 4
      %s18 = sphi 0, %s30
      %s19 = sphi 0, %s26
      %s20 = sphi 0, %s18
      %s21 = sphi 0, %s19
      %s22 = sphi 0, %s20
      %s23 = sphi 0, %s21
      %s35 = sphi 0, %s37
      %s38 = sphi 0, %s35
      %s39 = sphi 0, %s38
      %s55 = sphi 0, %s39
      %s59 = sphi 0, %s59
      %s61 = sphi 0, %s59
      %s62 = sphi 0, %s61
      %s76 = sphi 0, %s62
      %s80 = sphi 0, %s80
      %s82 = sphi 0, %s80
      %s83 = sphi 0, %s82
      %s97 = sphi 0, %s83
      %s105 = sphi 0, %s107
      %s108 = sphi 0, %s105
      %s109 = sphi 0, %s108
      %s125 = sphi 0, %s109
    $region4: #{outconv.1} parent=1 // loop_header_branch
      %14 = sbr.rel (%p12) target = $region8
    $region5: #{outconv.1} parent=1 // loop_body
      %s16 = ssub.s32 %s11, 1
      %s17 = ssub.s32 %s11, 2
      %s24 = sadd.s32 1, %s19
      %p25 = scmp.ge.s32.totalorder %s24, 1
      %s26 = scalar_select %p25, 0, %s24
      %s27 = sadd.s32 1, %s18
      %s28 = scalar_select %p25, %s27, %s18
      %p29 = scmp.ge.s32.totalorder %s28, 2
      %s30 = scalar_select %p29, 0, %s28
      %s31 = ssub.s32 %s18, %s30
      %s32 = ssub.s32 %s19, %s26
      %s33 = sor.u32 %s31, %s32
      %p34 = scmp.eq.s32.totalorder %s33, 0
      %s36 = sadd.s32 %s35, 1
      %s37 = scalar_select %p34, %s35, %s36
      %p40 = pneg %p34
      %p41 = scmp.eq.s32.totalorder %s11, 1
      %p42 = por %p40, %p41
      %p43 = scmp.ne.s32.totalorder %s35, %s38
      %p44 = scmp.eq.s32.totalorder %s11, 0
      %p45 = por %p43, %p44
      %p46 = scmp.ne.s32.totalorder %s35, %s38
      %p47 = scmp.eq.s32.totalorder %s16, 1
      %p48 = por %p46, %p47
      %p49 = scmp.ne.s32.totalorder %s38, %s39
      %p50 = scmp.eq.s32.totalorder %s16, 0
      %p51 = por %p49, %p50
      %p52 = scmp.ne.s32.totalorder %s38, %s39
      %p53 = scmp.eq.s32.totalorder %s17, 1
      %p54 = por %p52, %p53
      %p56 = scmp.ne.s32.totalorder %s39, %s55
      %p57 = scmp.eq.s32.totalorder %s17, 0
      %p58 = por %p56, %p57
      %s60 = sadd.s32 %s59, 1
      %p63 = scmp.eq.s32.totalorder %s11, 1
      %p64 = scmp.ne.s32.totalorder %s59, %s61
      %p65 = scmp.eq.s32.totalorder %s11, 0
      %p66 = por %p64, %p65
      %p67 = scmp.ne.s32.totalorder %s59, %s61
      %p68 = scmp.eq.s32.totalorder %s16, 1
      %p69 = por %p67, %p68
      %p70 = scmp.ne.s32.totalorder %s61, %s62
      %p71 = scmp.eq.s32.totalorder %s16, 0
      %p72 = por %p70, %p71
      %p73 = scmp.ne.s32.totalorder %s61, %s62
      %p74 = scmp.eq.s32.totalorder %s17, 1
      %p75 = por %p73, %p74
      %p77 = scmp.ne.s32.totalorder %s62, %s76
      %p78 = scmp.eq.s32.totalorder %s17, 0
      %p79 = por %p77, %p78
      %s81 = sadd.s32 %s80, 1
      %p84 = scmp.eq.s32.totalorder %s11, 1
      %p85 = scmp.ne.s32.totalorder %s80, %s82
      %p86 = scmp.eq.s32.totalorder %s11, 0
      %p87 = por %p85, %p86
      %p88 = scmp.ne.s32.totalorder %s80, %s82
      %p89 = scmp.eq.s32.totalorder %s16, 1
      %p90 = por %p88, %p89
      %p91 = scmp.ne.s32.totalorder %s82, %s83
      %p92 = scmp.eq.s32.totalorder %s16, 0
      %p93 = por %p91, %p92
      %p94 = scmp.ne.s32.totalorder %s82, %s83
      %p95 = scmp.eq.s32.totalorder %s17, 1
      %p96 = por %p94, %p95
      %p98 = scmp.ne.s32.totalorder %s83, %s97
      %p99 = scmp.eq.s32.totalorder %s17, 0
      %p100 = por %p98, %p99
      %s101 = ssub.s32 %s18, %s30
      %s102 = ssub.s32 %s19, %s26
      %s103 = sor.u32 %s101, %s102
      %p104 = scmp.eq.s32.totalorder %s103, 0
      %s106 = sadd.s32 %s105, 1
      %s107 = scalar_select %p104, %s105, %s106
      %p110 = pneg %p104
      %p111 = scmp.eq.s32.totalorder %s11, 1
      %p112 = por %p110, %p111
      %p113 = scmp.ne.s32.totalorder %s105, %s108
      %p114 = scmp.eq.s32.totalorder %s11, 0
      %p115 = por %p113, %p114
      %p116 = scmp.ne.s32.totalorder %s105, %s108
      %p117 = scmp.eq.s32.totalorder %s16, 1
      %p118 = por %p116, %p117
      %p119 = scmp.ne.s32.totalorder %s108, %s109
      %p120 = scmp.eq.s32.totalorder %s16, 0
      %p121 = por %p119, %p120
      %p122 = scmp.ne.s32.totalorder %s108, %s109
      %p123 = scmp.eq.s32.totalorder %s17, 1
      %p124 = por %p122, %p123
      %p126 = scmp.ne.s32.totalorder %s109, %s125
      %p127 = scmp.eq.s32.totalorder %s17, 0
      %p128 = por %p126, %p127
      %p129 = scmp.le.s32.totalorder 1, %s11
      %p130 = scmp.lt.s32.totalorder %s11, 3
      %p131 = pnand %p129, %p130
      %p132 = pneg %p131
      // Predicated region
      $region9: #{outconv.1} parent=5 // pred_check
        _
      $region10: #{outconv.1} parent=5 // pred_check_branch
        %134 = sbr.rel (%p131) target = $region12
      $region11: #{outconv.1} parent=5 // pred_region
        %s135 = ssub.s32 %s11, 1
        // Predicated region
        $region13: #{outconv.1} parent=11 // pred_check
          %p136 = pneg %p72
        $region14: #{outconv.1} parent=11 // pred_check_branch
          %138 = sbr.rel (%p136) target = $region16
        $region15: #{outconv.1} parent=11 // pred_region
          %s140 = ssub.s32 64, 64
          %141 = vsyncadd [#allocation3], %s140
          %s143 = sshll.u32 %s1, 4
          %s144 = int_to_ptr.vmem [resolvable:$true] %s143
          %146 = dma.vmem_to_smem %s144, 64, [#allocation2], [#allocation3]
        $region16: #{outconv.1} parent=11 // pred_fallthru
          _
        // Predicated region
        $region17: #{outconv.1} parent=11 // pred_check
          %p147 = pneg %p93
        $region18: #{outconv.1} parent=11 // pred_check_branch
          %149 = sbr.rel (%p147) target = $region20
        $region19: #{outconv.1} parent=11 // pred_region
          %s151 = ssub.s32 16, 16
          %152 = vsyncadd [#allocation5], %s151
          %s154 = sshll.u32 %s2, 4
          %s155 = int_to_ptr.vmem [resolvable:$true] %s154
          %157 = dma.vmem_to_smem %s155, 16, [#allocation4], [#allocation5]
        $region20: #{outconv.1} parent=11 // pred_fallthru
          _
      $region12: #{outconv.1} parent=5 // pred_fallthru
        _
      %p158 = scmp.lt.s32.totalorder %s11, 2
      // Predicated region
      $region21: #{outconv.1} parent=5 // pred_check
        %p159 = pneg %p158
      $region22: #{outconv.1} parent=5 // pred_check_branch
        %161 = sbr.rel (%p159) target = $region24
      $region23: #{outconv.1} parent=5 // pred_region
        // Predicated region
        $region25: #{outconv.1} parent=23 // pred_check
          %p162 = pneg %p45
        $region26: #{outconv.1} parent=23 // pred_check_branch
          %164 = sbr.rel (%p162) target = $region28
        $region27: #{outconv.1} parent=23 // pred_region
          %p165 = scmp.lt.s32.totalorder %s18, 1
          %s166 = scalar_select %p165, %s18, 1
          %p167 = scmp.lt.s32.totalorder %s19, 0
          %s168 = scalar_select %p167, %s19, 0
          %s169 = smul.addr %s166, 4
          %s170 = sadd.s32 %s168, %s169
          %s171 = smul.addr %s170, 2
          %s172 = scalar_lea.vmem %s0, %s171
        $region28: #{outconv.1} parent=23 // pred_fallthru
          _
      $region24: #{outconv.1} parent=5 // pred_fallthru
        _
      %p173 = scmp.le.s32.totalorder 1, %s11
      %p174 = scmp.lt.s32.totalorder %s11, 3
      %p175 = pnand %p173, %p174
      %p176 = pneg %p175
      // Predicated region
      $region29: #{outconv.1} parent=5 // pred_check
        _
      $region30: #{outconv.1} parent=5 // pred_check_branch
        %178 = sbr.rel (%p175) target = $region32
      $region31: #{outconv.1} parent=5 // pred_region
        %s179 = ssub.s32 %s11, 1
        // Predicated region
        $region33: #{outconv.1} parent=31 // pred_check
          %p180 = pneg %p72
        $region34: #{outconv.1} parent=31 // pred_check_branch
          %182 = sbr.rel (%p180) target = $region36
        $region35: #{outconv.1} parent=31 // pred_region
          %183 = dma.done [#allocation3], 64
        $region36: #{outconv.1} parent=31 // pred_fallthru
          _
        // Predicated region
        $region37: #{outconv.1} parent=31 // pred_check
          %p184 = pneg %p93
        $region38: #{outconv.1} parent=31 // pred_check_branch
          %186 = sbr.rel (%p184) target = $region40
        $region39: #{outconv.1} parent=31 // pred_region
          %187 = dma.done [#allocation5], 16
        $region40: #{outconv.1} parent=31 // pred_fallthru
          _
        %188 = sfence
        %p189 = scmp.lt.s32.totalorder %s20, 1
        %s190 = scalar_select %p189, %s20, 1
        %p191 = scmp.lt.s32.totalorder %s21, 0
        %s192 = scalar_select %p191, %s21, 0
        %s193 = smul.addr %s190, 4
        %s194 = sadd.s32 %s192, %s193
        %s195 = smul.addr %s194, 2
        %s196 = scalar_lea.vmem %s0, %s195
        %p197 = pneg %p51
        %p198 = pneg %p48
        %p199 = pneg %p72
        %p200 = pneg %p69
        %p201 = pneg %p93
        %p202 = pneg %p90
        %p203 = pneg %p121
        %p204 = pneg %p118
        %p205 = scmp.lt.s32.totalorder %s20, 1
        %s206 = scalar_select %p205, %s20, 1
        %p207 = scmp.lt.s32.totalorder %s21, 0
        %s208 = scalar_select %p207, %s21, 0
        %s209 = smul.addr %s206, 3
        %s210 = sadd.s32 %s208, %s209
        %s211 = smul.addr %s210, 2
        %s212 = scalar_lea.vmem %s3, %s211
        %p213 = scmp.lt.s32.totalorder %s20, 1
        %s214 = scalar_select %p213, %s20, 1
        %p215 = scmp.lt.s32.totalorder %s21, 0
        %s216 = scalar_select %p215, %s21, 0
        %s217 = smul.addr %s214, 4
        %s218 = sadd.s32 %s216, %s217
        %s219 = smul.addr %s218, 2
        %s220 = scalar_lea.vmem %s0, %s219
        %p221 = scmp.lt.s32.totalorder %s20, 1
        %s222 = scalar_select %p221, %s20, 1
        %p223 = scmp.lt.s32.totalorder %s21, 0
        %s224 = scalar_select %p223, %s21, 0
        %s225 = smul.addr %s222, 3
        %s226 = sadd.s32 %s224, %s225
        %s227 = smul.addr %s226, 2
        %s228 = scalar_lea.vmem %s3, %s227
        %v229 = vld [vmem:[%s220] sm:$0x3]
        %s230 = scalar_lea.vmem %s220, 2
        %v231 = vld [vmem:[%s230] sm:$0x3]
        %s232 = scalar_lea.vmem %s220, 4
        %v233 = vld [vmem:[%s232] sm:$0x3]
        %s234 = scalar_lea.vmem %s220, 6
        %v235 = vld [vmem:[%s234] sm:$0x3]
        %s236 = sld [smem:[#allocation2]]
        %v237 = vstv %s236
        %v238 = vmul.f32 %v229, %v237
        %s239 = sld [smem:[#allocation2 + $0x1]]
        %v240 = vstv %s239
        %v241 = vmul.f32 %v231, %v240
        %v242 = vadd.f32 %v238, %v241
        %s243 = sld [smem:[#allocation2 + $0x2]]
        %v244 = vstv %s243
        %v245 = vmul.f32 %v233, %v244
        %v246 = vadd.f32 %v242, %v245
        %s247 = sld [smem:[#allocation2 + $0x3]]
        %v248 = vstv %s247
        %v249 = vmul.f32 %v235, %v248
        %v250 = vadd.f32 %v246, %v249
        %s251 = sld [smem:[#allocation4]]
        %v252 = vstv %s251
        %v253 = vadd.f32 %v250, %v252
        %254 = vst [vmem:[%s228] sm:$0x3] %v253
        %s255 = sld [smem:[#allocation2 + $0x80]]
        %v256 = vstv %s255
        %v257 = vmul.f32 %v229, %v256
        %s258 = sld [smem:[#allocation2 + $0x81]]
        %v259 = vstv %s258
        %v260 = vmul.f32 %v231, %v259
        %v261 = vadd.f32 %v257, %v260
        %s262 = sld [smem:[#allocation2 + $0x82]]
        %v263 = vstv %s262
        %v264 = vmul.f32 %v233, %v263
        %v265 = vadd.f32 %v261, %v264
        %s266 = sld [smem:[#allocation2 + $0x83]]
        %v267 = vstv %s266
        %v268 = vmul.f32 %v235, %v267
        %v269 = vadd.f32 %v265, %v268
        %s270 = sld [smem:[#allocation4 + $0x1]]
        %v271 = vstv %s270
        %v272 = vadd.f32 %v269, %v271
        %s273 = scalar_lea.vmem %s228, 2
        %274 = vst [vmem:[%s273] sm:$0x3] %v272
        %s275 = sld [smem:[#allocation2 + $0x100]]
        %v276 = vstv %s275
        %v277 = vmul.f32 %v229, %v276
        %s278 = sld [smem:[#allocation2 + $0x101]]
        %v279 = vstv %s278
        %v280 = vmul.f32 %v231, %v279
        %v281 = vadd.f32 %v277, %v280
        %s282 = sld [smem:[#allocation2 + $0x102]]
        %v283 = vstv %s282
        %v284 = vmul.f32 %v233, %v283
        %v285 = vadd.f32 %v281, %v284
        %s286 = sld [smem:[#allocation2 + $0x103]]
        %v287 = vstv %s286
        %v288 = vmul.f32 %v235, %v287
        %v289 = vadd.f32 %v285, %v288
        %s290 = sld [smem:[#allocation4 + $0x2]]
        %v291 = vstv %s290
        %v292 = vadd.f32 %v289, %v291
        %s293 = scalar_lea.vmem %s228, 4
        %294 = vst [vmem:[%s293] sm:$0x3] %v292
        %p295 = scmp.lt.s32.totalorder %s20, 1
        %s296 = scalar_select %p295, %s20, 1
        %p297 = scmp.lt.s32.totalorder %s21, 0
        %s298 = scalar_select %p297, %s21, 0
        %s299 = smul.addr %s296, 3
        %s300 = sadd.s32 %s298, %s299
        %s301 = smul.addr %s300, 2
        %s302 = scalar_lea.vmem %s3, %s301
        // Predicated region
        $region41: #{outconv.1} parent=31 // pred_check
          %p303 = pneg %p118
        $region42: #{outconv.1} parent=31 // pred_check_branch
          %305 = sbr.rel (%p303) target = $region44
        $region43: #{outconv.1} parent=31 // pred_region
          _
        $region44: #{outconv.1} parent=31 // pred_fallthru
          _
      $region32: #{outconv.1} parent=5 // pred_fallthru
        _
      %p306 = scmp.le.s32.totalorder 2, %s11
      // Predicated region
      $region45: #{outconv.1} parent=5 // pred_check
        %p307 = pneg %p306
      $region46: #{outconv.1} parent=5 // pred_check_branch
        %309 = sbr.rel (%p307) target = $region48
      $region47: #{outconv.1} parent=5 // pred_region
        %s310 = ssub.s32 %s11, 2
        // Predicated region
        $region49: #{outconv.1} parent=47 // pred_check
          %p311 = pneg %p124
        $region50: #{outconv.1} parent=47 // pred_check_branch
          %313 = sbr.rel (%p311) target = $region52
        $region51: #{outconv.1} parent=47 // pred_region
          %p314 = scmp.lt.s32.totalorder %s22, 1
          %s315 = scalar_select %p314, %s22, 1
          %p316 = scmp.lt.s32.totalorder %s23, 0
          %s317 = scalar_select %p316, %s23, 0
          %s318 = smul.addr %s315, 3
          %s319 = sadd.s32 %s317, %s318
          %s320 = smul.addr %s319, 2
          %s321 = scalar_lea.vmem %s3, %s320
        $region52: #{outconv.1} parent=47 // pred_fallthru
          _
      $region48: #{outconv.1} parent=5 // pred_fallthru
        _
    $region6: #{outconv.1} parent=1 // loop_footer
      %s15 = sadd.s32 1, %s11
    $region7: #{outconv.1} parent=1 // loop_footer_branch
      %10 = sbr.rel target = $region3
    $region8: #{outconv.1} parent=1 // loop_exit
      _
    %322 = vsyncpa [#allocation3], 1
    %s323 = scalar_lea.sflag [#allocation3], 1
    %324 = vsyncpa %s323, 1
    %325 = vsyncpa [#allocation5], 1

</llo_original>
